<compile_context>
chip_gen: v6e
topology: v6e:2x2x1
jax: 0.10.0
libtpu: 0.0.40
codegen_flags: <defaults>
</compile_context>

<pallas_src>
import functools

import jax
import jax.numpy as jnp
from jax.experimental import pallas as pl
from jax.experimental.pallas import tpu as pltpu


def _layernorm_kernel(x_ref, w_ref, b_ref, o_ref, *, eps, inv_hidden, bf16_affine):
    x = x_ref[...]                                            # (tile_rows, hidden_p)
    # Fused statistics pass: sum(x) and sum(x*x) from the same loaded tile
    # (f32 accumulation), var = E[x^2] - mean^2 (clamped for cancellation).
    xf = x.astype(jnp.float32)
    s = jnp.sum(xf, axis=-1, keepdims=True)                   # (tile_rows, 1)
    ss = jnp.sum(xf * xf, axis=-1, keepdims=True)
    mean = s * inv_hidden                                     # divide by TRUE hidden
    var = jnp.maximum(ss * inv_hidden - mean * mean, 0.0)     # unbiased=False
    inv_std = jax.lax.rsqrt(var + eps)
    if bf16_affine:
        # v6e/v7x: reductions + rsqrt in f32 above, but the per-element
        # normalize/scale/shift runs in native bf16 (packed 2x per lane) so the
        # kernel stays HBM-bound instead of VALU-slot-bound.
        cdt = x.dtype
        w = w_ref[...].astype(cdt)
        b = b_ref[...].astype(cdt)
        out = (x - mean.astype(cdt)) * inv_std.astype(cdt) * w + b
    else:
        w = w_ref[...].astype(jnp.float32)
        b = b_ref[...].astype(jnp.float32)
        out = (xf - mean) * inv_std * w + b
    o_ref[...] = out.astype(o_ref.dtype)


def _device_kind():
    try:
        return jax.devices()[0].device_kind.lower()
    except Exception:
        return ""


def _supports_bf16_vpu():
    """v5e (and older) has no bf16 VALU/EUP; only enable bf16 math on v6/v7."""
    kind = _device_kind()
    return ("v6" in kind) or ("v7" in kind)


def _num_tensorcores():
    """v7x shards a 'parallel' grid axis across its 2 TensorCores."""
    return 2 if "v7" in _device_kind() else 1


def _vmem_capacity_bytes():
    """Per-TensorCore VMEM capacity; conservative fallback (v7x = 64 MiB)."""
    try:
        return int(pltpu.get_tpu_info().vmem_capacity_bytes)
    except Exception:
        return 64 << 20


def _bytes_per_row(hidden, itemsize, temp_bytes):
    # Double-buffered input + output DMA tiles, plus ~4-8 B/elem of
    # f32/vreg temporaries (at most one f32-ish copy of the tile).
    return hidden * (2 * itemsize + 2 * itemsize + temp_bytes)


def _pick_tile_rows(rows, hidden, dtype, vmem_capacity, temp_bytes, num_cores):
    itemsize = jnp.dtype(dtype).itemsize
    # Sublane packing multiple: 8 rows for 32-bit, 16 for bf16, 32 for 8-bit.
    mult = 8 * max(1, 4 // max(itemsize, 1))
    bpr = _bytes_per_row(hidden, itemsize, temp_bytes)
    vmem_budget = vmem_capacity // 2
    if mult * bpr > vmem_budget:
        # TODO(synk): add a two-pass hidden-blocked path for very large hidden.
        raise ValueError(
            f"hidden={hidden} is too large for the single-pass row-tiled "
            "LayerNorm kernel (would exceed the VMEM budget).")

    tile_from_vmem = vmem_budget // bpr
    # Target ~4 MiB of input per grid step (mem-bound streaming only reaches
    # ~85% of HBM roofline at >= ~1-4 MiB blocks); no hard small-row cap.
    tile_from_target = max((4 << 20) // (hidden * itemsize), mult)
    tile = min(tile_from_vmem, tile_from_target)

    rows_rounded = -(-rows // mult) * mult          # don't exceed the problem
    tile = min(tile, rows_rounded)
    tile = max((tile // mult) * mult, mult)

    # Balance grid-step count across TensorCores (v7x): aim for a multiple of
    # num_cores steps and >= ~4 steps per core when the problem permits.
    if num_cores > 1 and rows_rounded > mult:
        max_steps = rows_rounded // mult
        steps = -(-rows // tile)
        want = max(steps, 4 * num_cores)
        want = -(-want // num_cores) * num_cores
        if want > max_steps:
            want = (max_steps // num_cores) * num_cores
        if want >= num_cores:
            new_tile = -(-rows // want)
            new_tile = -(-new_tile // mult) * mult
            tile = max(mult, min(tile, new_tile))
    return tile


def layer_norm(x, weight, bias, eps=1e-05, tile_rows=None):
    """LayerNorm over the last dim of x, with scale `weight` and shift `bias`."""
    orig_shape = x.shape
    hidden = orig_shape[-1]
    rows = 1
    for d in orig_shape[:-1]:
        rows *= d

    bf16_affine = (x.dtype == jnp.bfloat16) and _supports_bf16_vpu()
    affine_dtype = x.dtype if bf16_affine else jnp.float32

    x2 = x.reshape(rows, hidden)
    w2 = weight.reshape(1, hidden).astype(affine_dtype)
    b2 = bias.reshape(1, hidden).astype(affine_dtype)

    # Keep the last dim lane-dense (multiple of 128) so every output store is
    # a full unmasked vst; padded lanes get weight=0/bias=0 -> output 0.
    hidden_p = -(-hidden // 128) * 128
    if hidden_p != hidden:
        pad = hidden_p - hidden
        x2 = jnp.pad(x2, ((0, 0), (0, pad)))
        w2 = jnp.pad(w2, ((0, 0), (0, pad)))
        b2 = jnp.pad(b2, ((0, 0), (0, pad)))

    itemsize = jnp.dtype(x.dtype).itemsize
    temp_bytes = 4 if bf16_affine else 8
    vmem_cap = _vmem_capacity_bytes()
    num_cores = _num_tensorcores()
    if tile_rows is None:
        tile_rows = _pick_tile_rows(rows, hidden_p, x.dtype, vmem_cap,
                                    temp_bytes, num_cores)

    per_step_bytes = tile_rows * _bytes_per_row(hidden_p, itemsize, temp_bytes)
    vmem_limit = max(int(per_step_bytes * 1.25) + (4 << 20), 32 << 20)
    vmem_limit = min(vmem_limit, (vmem_cap * 3) // 4)

    grid = (pl.cdiv(rows, tile_rows),)  # ragged last block handled by Pallas

    kernel = functools.partial(
        _layernorm_kernel,
        eps=float(eps),
        inv_hidden=1.0 / float(hidden),   # divide by the TRUE hidden, not padded
        bf16_affine=bf16_affine,
    )

    out = pl.pallas_call(
        kernel,
        out_shape=jax.ShapeDtypeStruct((rows, hidden_p), x.dtype),
        grid_spec=pltpu.PrefetchScalarGridSpec(
            num_scalar_prefetch=0,
            grid=grid,
            in_specs=[
                pl.BlockSpec((tile_rows, hidden_p), lambda i: (i, 0)),
                pl.BlockSpec((1, hidden_p), lambda i: (0, 0)),
                pl.BlockSpec((1, hidden_p), lambda i: (0, 0)),
            ],
            out_specs=pl.BlockSpec((tile_rows, hidden_p), lambda i: (i, 0)),
        ),
        compiler_params=pltpu.CompilerParams(
            dimension_semantics=("parallel",),   # shards rows across v7x's 2 TCs
            vmem_limit_bytes=vmem_limit,
        ),
    )(x2, w2, b2)

    if hidden_p != hidden:
        out = out[:, :hidden]
    return out.reshape(orig_shape)


def _reference(x, weight, bias, eps):
    xf = x.astype(jnp.float32)
    mean = jnp.mean(xf, axis=-1, keepdims=True)
    var = jnp.mean((xf - mean) ** 2, axis=-1, keepdims=True)
    return (xf - mean) / jnp.sqrt(var + eps) * weight.astype(jnp.float32) \
        + bias.astype(jnp.float32)


if __name__ == "__main__":
    key = jax.random.PRNGKey(0)
    k1, k2, k3, k4, k5 = jax.random.split(key, 5)

    # --- Test 1: default reset_parameters() (ones / zeros), f32, hidden=128.
    batch, seq, hidden = 2, 8, 128
    x = jax.random.normal(k1, (batch, seq, hidden), dtype=jnp.float32)
    weight = jnp.ones((hidden,), dtype=jnp.float32)
    bias = jnp.zeros((hidden,), dtype=jnp.float32)
    out = layer_norm(x, weight, bias, eps=1e-05)
    jax.block_until_ready(out)
    assert out.shape == x.shape
    assert jnp.allclose(out, _reference(x, weight, bias, 1e-05),
                        atol=1e-5, rtol=1e-5)

    # --- Test 2: ragged rows + non-128-multiple hidden, non-trivial affine.
    hidden2 = 192
    x2 = jax.random.normal(k2, (3, 5, hidden2), dtype=jnp.float32)
    w2 = jax.random.normal(k3, (hidden2,), dtype=jnp.float32)
    b2 = jax.random.normal(k4, (hidden2,), dtype=jnp.float32)
    out2 = layer_norm(x2, w2, b2, eps=1e-05)
    jax.block_until_ready(out2)
    assert out2.shape == x2.shape
    assert jnp.allclose(out2, _reference(x2, w2, b2, 1e-05),
                        atol=1e-4, rtol=1e-4)

    # --- Test 3: bf16 I/O (bf16 affine path on v6e/v7x, f32 math on v5e).
    hidden3 = 256
    x3 = jax.random.normal(k5, (2, 8, hidden3), dtype=jnp.bfloat16)
    w3 = jnp.ones((hidden3,), dtype=jnp.bfloat16)
    b3 = jnp.zeros((hidden3,), dtype=jnp.bfloat16)
    out3 = layer_norm(x3, w3, b3, eps=1e-05)
    jax.block_until_ready(out3)
    assert out3.shape == x3.shape
    assert jnp.allclose(out3.astype(jnp.float32),
                        _reference(x3, w3, b3, 1e-05),
                        atol=5e-2, rtol=5e-2)

    print("KERNEL_OK")
</pallas_src>

<mosaic_0001>
module attributes {stable_mosaic.version = 11 : i64} {
  func.func @_layernorm_kernel(%arg0: i32, %arg1: memref<16x128xf32, #tpu.memory_space<vmem>>, %arg2: memref<1x128xf32, #tpu.memory_space<vmem>>, %arg3: memref<1x128xf32, #tpu.memory_space<vmem>>, %arg4: memref<16x128xf32, #tpu.memory_space<vmem>>) attributes {dimension_semantics = [#tpu.dimension_semantics<parallel>], iteration_bounds = array<i64: 1>, scalar_prefetch = 0 : i64, scratch_operands = 0 : i64, tpu.core_type = #tpu.core_type<tc>, window_params = [{transform_indices = @transform_0, window_bounds = array<i64: 16, 128>}, {pipeline_mode = #tpu.pipeline_mode<synchronous>, transform_indices = @transform_1, window_bounds = array<i64: 1, 128>}, {pipeline_mode = #tpu.pipeline_mode<synchronous>, transform_indices = @transform_2, window_bounds = array<i64: 1, 128>}, {transform_indices = @transform_3, window_bounds = array<i64: 16, 128>}]} {
    %c0 = arith.constant 0 : index
    %c0_0 = arith.constant 0 : index
    %0 = vector.load %arg1[%c0, %c0_0] : memref<16x128xf32, #tpu.memory_space<vmem>>, vector<16x128xf32>
    %cst = arith.constant dense<0.000000e+00> : vector<16xf32>
    %1 = vector.multi_reduction <add>, %0, %cst [1] : vector<16x128xf32> to vector<16xf32>
    %2 = vector.shape_cast %1 : vector<16xf32> to vector<16x1xf32>
    %3 = arith.mulf %0, %0 : vector<16x128xf32>
    %cst_1 = arith.constant dense<0.000000e+00> : vector<16xf32>
    %4 = vector.multi_reduction <add>, %3, %cst_1 [1] : vector<16x128xf32> to vector<16xf32>
    %5 = vector.shape_cast %4 : vector<16xf32> to vector<16x1xf32>
    %cst_2 = arith.constant 7.812500e-03 : f32
    %6 = vector.broadcast %cst_2 : f32 to vector<16x1xf32>
    %7 = arith.mulf %2, %6 : vector<16x1xf32>
    %cst_3 = arith.constant 7.812500e-03 : f32
    %8 = vector.broadcast %cst_3 : f32 to vector<16x1xf32>
    %9 = arith.mulf %5, %8 : vector<16x1xf32>
    %10 = arith.mulf %7, %7 : vector<16x1xf32>
    %11 = arith.subf %9, %10 : vector<16x1xf32>
    %cst_4 = arith.constant 0.000000e+00 : f32
    %12 = vector.broadcast %cst_4 : f32 to vector<16x1xf32>
    %13 = arith.maximumf %11, %12 : vector<16x1xf32>
    %cst_5 = arith.constant 9.99999974E-6 : f32
    %14 = vector.broadcast %cst_5 : f32 to vector<16x1xf32>
    %15 = arith.addf %13, %14 : vector<16x1xf32>
    %16 = math.rsqrt %15 : vector<16x1xf32>
    %c0_6 = arith.constant 0 : index
    %c0_7 = arith.constant 0 : index
    %17 = vector.load %arg2[%c0_6, %c0_7] : memref<1x128xf32, #tpu.memory_space<vmem>>, vector<1x128xf32>
    %c0_8 = arith.constant 0 : index
    %c0_9 = arith.constant 0 : index
    %18 = vector.load %arg3[%c0_8, %c0_9] : memref<1x128xf32, #tpu.memory_space<vmem>>, vector<1x128xf32>
    %19 = vector.broadcast %7 : vector<16x1xf32> to vector<16x128xf32>
    %20 = arith.subf %0, %19 : vector<16x128xf32>
    %21 = vector.broadcast %16 : vector<16x1xf32> to vector<16x128xf32>
    %22 = arith.mulf %20, %21 : vector<16x128xf32>
    %23 = vector.broadcast %17 : vector<1x128xf32> to vector<16x128xf32>
    %24 = arith.mulf %22, %23 : vector<16x128xf32>
    %25 = vector.broadcast %18 : vector<1x128xf32> to vector<16x128xf32>
    %26 = arith.addf %24, %25 : vector<16x128xf32>
    %c0_10 = arith.constant 0 : index
    %c0_11 = arith.constant 0 : index
    %27 = vector.load %arg4[%c0_10, %c0_11] : memref<16x128xf32, #tpu.memory_space<vmem>>, vector<16x128xf32>
    tpu.vector_store %arg4[%c0_10, %c0_11], %26 {strides = array<i32>} : memref<16x128xf32, #tpu.memory_space<vmem>>, vector<16x128xf32>,
    return
  }
  func.func @transform_0(%arg0: i32) -> (i32, i32) {
    %c0_i32 = arith.constant 0 : i32
    %c0_i32_0 = arith.constant 0 : i32
    return %arg0, %c0_i32 : i32, i32
  }
  func.func @transform_1(%arg0: i32) -> (i32, i32) {
    %c0_i32 = arith.constant 0 : i32
    %c0_i32_0 = arith.constant 0 : i32
    %c0_i32_1 = arith.constant 0 : i32
    return %c0_i32, %c0_i32_0 : i32, i32
  }
  func.func @transform_2(%arg0: i32) -> (i32, i32) {
    %c0_i32 = arith.constant 0 : i32
    %c0_i32_0 = arith.constant 0 : i32
    %c0_i32_1 = arith.constant 0 : i32
    return %c0_i32, %c0_i32_0 : i32, i32
  }
  func.func @transform_3(%arg0: i32) -> (i32, i32) {
    %c0_i32 = arith.constant 0 : i32
    %c0_i32_0 = arith.constant 0 : i32
    return %arg0, %c0_i32 : i32, i32
  }
}

</mosaic_0001>

<llo_original>
// kernel: tpu_custom_call.1
$region0: #{tpu_custom_call.1}
  #allocation0 [shape = 'u32[]', space=smem, size = 0x4, offset = 0x4, fixed_abs, tag = 'smem constant byte address 0x4 - core index']
  #allocation1 [shape = 'u32[144,128]{1,0:T(1,128)}', space=vmem, size = 0x12000, scoped, tag = 'internal scratch']
  %s0 = inlined_call_operand.hbm [shape: f32[16,128], index: 0, kind: input, shape index: {}]
  %s1 = inlined_call_operand.vmem [shape: f32[1,128], index: 1, kind: input, shape index: {}]
  %s2 = inlined_call_operand.vmem [shape: f32[1,128], index: 2, kind: input, shape index: {}]
  %s3 = inlined_call_operand.hbm [shape: f32[16,128], index: 3, kind: output, shape index: {}]
  %s4 = sld [smem:[#allocation0]]
  $region26: #{tpu_custom_call.1} parent=0
    _
  %s6 = ssub.s32 1, %s4
  %s7 = scalar_select 0, %s6, %s4
  $region1: #{tpu_custom_call.1} parent=0
    #allocation2 [shape = 'u8[8192]{0}', space=vmem, size = 0x2000, scoped, tag = 'input window, operand 0, single buffered']
    #allocation3 [shape = 's32[1]{0}', space=sflag, size = 0x4, scoped, tag = 'scoped memory for tpu_custom_call.1']
    #allocation4 [shape = 's32[1]{0}', space=sflag, size = 0x4, scoped, tag = 'scoped memory for tpu_custom_call.1']
    #allocation5 [shape = 'u8[8192]{0}', space=vmem, size = 0x2000, scoped, tag = 'output window, operand 0, single buffered']
    %8 = vsyncpa [#allocation3], 0
    %9 = vsyncpa [#allocation4], 0
    // Predicated region
    $region2: #{tpu_custom_call.1} parent=1 // pred_check
      _
    $region3: #{tpu_custom_call.1} parent=1 // pred_check_branch
      %11 = sbr.rel (0) target = $region5
    $region4: #{tpu_custom_call.1} parent=1 // pred_region
      %s13 = ssub.s32 256, 256
      %14 = vsyncadd [#allocation3], %s13
      %s15 = sshll.u32 [#allocation2], 4
      %s16 = int_to_ptr.vmem [resolvable:$true] %s15
      %21 = dma.hbm_to_vmem [thread:$0]  %s0, 256, %s16, [#allocation3], 128, 128, 8
    $region5: #{tpu_custom_call.1} parent=1 // pred_fallthru
      _
    // Predicated region
    $region6: #{tpu_custom_call.1} parent=1 // pred_check
      _
    $region7: #{tpu_custom_call.1} parent=1 // pred_check_branch
      %23 = sbr.rel (0) target = $region9
    $region8: #{tpu_custom_call.1} parent=1 // pred_region
      _
    $region9: #{tpu_custom_call.1} parent=1 // pred_fallthru
      _
    // Predicated region
    $region10: #{tpu_custom_call.1} parent=1 // pred_check
      _
    $region11: #{tpu_custom_call.1} parent=1 // pred_check_branch
      %25 = sbr.rel (0) target = $region13
    $region12: #{tpu_custom_call.1} parent=1 // pred_region
      _
    $region13: #{tpu_custom_call.1} parent=1 // pred_fallthru
      _
    // Predicated region
    $region14: #{tpu_custom_call.1} parent=1 // pred_check
      _
    $region15: #{tpu_custom_call.1} parent=1 // pred_check_branch
      %27 = sbr.rel (0) target = $region17
    $region16: #{tpu_custom_call.1} parent=1 // pred_region
      %28 = dma.done [#allocation3], 256
    $region17: #{tpu_custom_call.1} parent=1 // pred_fallthru
      _
    %v29 = vld [vmem:[#allocation2] sm:$0xff]
    %v30 = vld [vmem:[#allocation2 + $0x8] sm:$0xff]
    %31 = vadd.xlane.f32.xlu0 %v29
    %v32 = vpop.xlane.xlu0 %31
    %33 = vadd.xlane.f32.xlu0 %v30
    %v34 = vpop.xlane.xlu0 %33
    %v35 = vmul.f32 %v29, %v29
    %v36 = vmul.f32 %v30, %v30
    %37 = vadd.xlane.f32.xlu0 %v35
    %v38 = vpop.xlane.xlu0 %37
    %39 = vadd.xlane.f32.xlu0 %v36
    %v40 = vpop.xlane.xlu0 %39
    %v41 = vmul.f32 %v32, 0.0078125
    %v42 = vmul.f32 %v34, 0.0078125
    %v43 = vmul.f32 %v38, 0.0078125
    %v44 = vmul.f32 %v40, 0.0078125
    %v45 = vmul.f32 %v41, %v41
    %v46 = vmul.f32 %v42, %v42
    %v47 = vsub.f32 %v43, %v45
    %v48 = vsub.f32 %v44, %v46
    %v49 = vmax.f32 %v47, 0.0
    %v50 = vmax.f32 %v48, 0.0
    %v51 = vadd.f32 %v49, 1e-05
    %v52 = vadd.f32 %v50, 1e-05
    %v53 = vrsqrt.pop %v51
    %v54 = vrsqrt.pop %v52
    %v55 = vld [vmem:[%s1] sm:$0x1]
    %v56 = vld [vmem:[%s2] sm:$0x1]
    %v57 = vsub.f32 %v29, %v41
    %v58 = vsub.f32 %v30, %v42
    %v59 = vmul.f32 %v57, %v53
    %v60 = vmul.f32 %v58, %v54
    %v62 = vlaneseq
    %v63 = vshrl.u32 %v62, 7
    %v64 = vsub.s32 0, %v63
    %v65 = vrot.slane %v55, %v64
    %v67 = vmul.f32 %v59, %v65
    %v68 = vmul.f32 %v60, %v65
    %v70 = vlaneseq
    %v71 = vshrl.u32 %v70, 7
    %v72 = vsub.s32 0, %v71
    %v73 = vrot.slane %v56, %v72
    %v75 = vadd.f32 %v67, %v73
    %v76 = vadd.f32 %v68, %v73
    %77 = vst [vmem:[#allocation5] sm:$0xff] %v75
    %78 = vst [vmem:[#allocation5 + $0x8] sm:$0xff] %v76
    // Predicated region
    $region18: #{tpu_custom_call.1} parent=1 // pred_check
      _
    $region19: #{tpu_custom_call.1} parent=1 // pred_check_branch
      %80 = sbr.rel (0) target = $region21
    $region20: #{tpu_custom_call.1} parent=1 // pred_region
      %s82 = ssub.s32 256, 256
      %83 = vsyncadd [#allocation4], %s82
      %s84 = sshll.u32 [#allocation5], 4
      %s85 = int_to_ptr.vmem [resolvable:$true] %s84
      %90 = dma.vmem_to_hbm [thread:$0]  %s85, 256, %s3, [#allocation4], 128, 128, 8
    $region21: #{tpu_custom_call.1} parent=1 // pred_fallthru
      _
    // Predicated region
    $region22: #{tpu_custom_call.1} parent=1 // pred_check
      _
    $region23: #{tpu_custom_call.1} parent=1 // pred_check_branch
      %92 = sbr.rel (0) target = $region25
    $region24: #{tpu_custom_call.1} parent=1 // pred_region
      %93 = dma.done [#allocation4], 256
    $region25: #{tpu_custom_call.1} parent=1 // pred_fallthru
      _
    %94 = vsyncpa [#allocation3], 1
    %95 = vsyncpa [#allocation4], 1

</llo_original>
